<compile_context>
chip_gen: v7x
topology: tpu7x:2x2x1
jax: 0.10.0
libtpu: 0.0.40
codegen_flags: <defaults>
</compile_context>

<pallas_src>
import jax
import jax.numpy as jnp
from jax import lax
from jax.experimental import pallas as pl
from jax.experimental.pallas import tpu as pltpu


def _round_up(x: int, k: int) -> int:
    return ((x + k - 1) // k) * k


def _device_kind() -> str:
    try:
        return jax.devices()[0].device_kind.lower()
    except Exception:
        return ""


def _num_tensorcores() -> int:
    """Best-effort TensorCores-per-device: 2 on megacore chips, else 1."""
    kind = _device_kind()
    if ("v4" in kind) or ("v5p" in kind) or ("v7" in kind) or ("7x" in kind):
        return 2
    return 1


def _default_tile_bytes() -> int:
    """Per-input-buffer VMEM budget (double-buffered by the BlockSpec pipeline)."""
    kind = _device_kind()
    if ("v6" in kind) or ("v7" in kind) or ("7x" in kind):
        return 8 << 20     # 2 x 8 MiB buffers, well under the 32 MiB scoped default
    return 4 << 20         # v5e scoped default is 16 MiB -> keep 2 x 4 MiB


def _make_n3_kernel(m, rank, tile_m, chunk_rows, tiles_per_core, need_mask):
    nchunks = tile_m // chunk_rows
    unroll = max(1, min(8, nchunks))

    def kernel(x_ref, o_ref):
        # Zero the per-core resident accumulator at the start of the reduction axis.
        @pl.when(pl.program_id(1) == 0)
        def _():
            o_ref[...] = jnp.zeros_like(o_ref)

        # Logical (unclamped) start row of this tile in the flat [m, rank] input.
        tile_start = (pl.program_id(0) * tiles_per_core + pl.program_id(1)) * tile_m

        if need_mask:
            row_iota = lax.broadcasted_iota(jnp.int32, (chunk_rows, rank), 0)

        def body(j, acc):
            start = pl.multiple_of(j * chunk_rows, chunk_rows)
            x = x_ref[pl.ds(start, chunk_rows), :].astype(jnp.float32)
            cube = jnp.abs(x) * x * x            # == |x|^3 (x*x >= 0); VPU only
            if need_mask:
                rows_valid = m - (tile_start + j * chunk_rows)
                cube = jnp.where(row_iota < rows_valid, cube, 0.0)
            return acc + cube

        acc = lax.fori_loop(
            0, nchunks, body,
            jnp.zeros((chunk_rows, rank), jnp.float32),
            unroll=unroll,
        )
        o_ref[...] += acc

    return kernel


def _sum_abs_cube_pallas(x, *, num_parallel, tile_bytes):
    """sum(|x|^3) of a 2-D [m, rank] array with one mem-bound Pallas kernel."""
    m, rank = x.shape
    itemsize = jnp.dtype(x.dtype).itemsize

    # Streaming chunk height: multiple of the sublane packing of the input dtype
    # (8 rows/vreg f32, 16 bf16, 32 int8/fp8), targeting ~8K f32 elements so the
    # fori_loop carry stays in a handful of vregs.
    pack = {4: 8, 2: 16, 1: 32}.get(itemsize, 8)
    chunk_rows = max(pack, (8192 // max(1, rank)) // pack * pack)

    # Largest row tile that fits the per-buffer VMEM budget, but no bigger than
    # the work each core actually has.
    tile_cap = max(chunk_rows,
                   (tile_bytes // max(1, rank * itemsize)) // chunk_rows * chunk_rows)
    rows_per_core = pl.cdiv(m, num_parallel)
    tile_m = min(tile_cap, _round_up(rows_per_core, chunk_rows))

    n_blocks = pl.cdiv(m, tile_m)
    tiles_per_core = pl.cdiv(n_blocks, num_parallel)
    need_mask = (num_parallel * tiles_per_core * tile_m) != m

    def x_index_map(p, i):
        # Clamp so we never read a fully out-of-bounds block; the kernel masks
        # logically-out-of-range rows to zero, so duplicated blocks contribute 0.
        return (jnp.minimum(p * tiles_per_core + i, n_blocks - 1), 0)

    kernel = _make_n3_kernel(m, rank, tile_m, chunk_rows, tiles_per_core, need_mask)

    out = pl.pallas_call(
        kernel,
        out_shape=jax.ShapeDtypeStruct((num_parallel * chunk_rows, rank), jnp.float32),
        grid_spec=pltpu.PrefetchScalarGridSpec(
            num_scalar_prefetch=0,
            grid=(num_parallel, tiles_per_core),
            in_specs=[pl.BlockSpec((tile_m, rank), x_index_map)],
            out_specs=pl.BlockSpec((chunk_rows, rank), lambda p, i: (p, 0)),
        ),
        compiler_params=pltpu.CompilerParams(
            dimension_semantics=("parallel", "arbitrary"),
        ),
        cost_estimate=pl.CostEstimate(
            flops=4 * m * rank,
            transcendentals=0,
            bytes_accessed=m * rank * itemsize + num_parallel * chunk_rows * rank * 4,
        ),
    )(x)

    # Tiny final lane/sublane collapse of the per-core partial sums.
    return jnp.sum(out)


def _sum_abs_cube(x, *, min_pallas_elements=1 << 20, num_parallel=None, tile_bytes=None):
    x = jnp.asarray(x)
    if x.ndim != 2 or x.size < max(1, min_pallas_elements):
        # Small-input fallback: kernel launch + pipeline overhead dwarfs the work.
        xf = x.astype(jnp.float32)
        return jnp.sum(jnp.abs(xf) ** 3)
    if num_parallel is None:
        num_parallel = _num_tensorcores()
    if tile_bytes is None:
        tile_bytes = _default_tile_bytes()
    return _sum_abs_cube_pallas(x, num_parallel=num_parallel, tile_bytes=tile_bytes)


def n3_forward(factors, weight: float, *, min_pallas_elements=1 << 20) -> jax.Array:
    """Exact semantics of N3.forward for a tuple/list of factor matrices."""
    factors = [jnp.asarray(f) for f in factors]
    batch = factors[0].shape[0]
    w = jnp.asarray(weight, dtype=jnp.float32)

    # One launch per factor (weight is common, so factoring it out is exact);
    # no concatenate -> no extra full HBM read+write of every factor.
    total = jnp.asarray(0.0, dtype=jnp.float32)
    for f in factors:
        total = total + _sum_abs_cube(f, min_pallas_elements=min_pallas_elements)
    return (w * total) / batch


if __name__ == "__main__":
    weight = 0.05  # deterministic "parameter" from __init__(weight)

    def ref_n3(fs, w):
        b = fs[0].shape[0]
        return sum(w * jnp.sum(jnp.abs(f.astype(jnp.float32)) ** 3) for f in fs) / b

    # 1) Small factors consistent with typical (lhs, rel, rhs) embeddings:
    #    takes the cheap XLA fallback path.
    k1, k2, k3 = jax.random.split(jax.random.PRNGKey(0), 3)
    batch, rank = 16, 128
    factors = (
        jax.random.normal(k1, (batch, rank), dtype=jnp.float32),
        jax.random.normal(k2, (batch, rank), dtype=jnp.float32),
        jax.random.normal(k3, (batch, rank), dtype=jnp.float32),
    )
    out_small = jax.block_until_ready(n3_forward(factors, weight))
    assert jnp.allclose(out_small, ref_n3(factors, weight), rtol=1e-4, atol=1e-5), (
        out_small, ref_n3(factors, weight))

    # 2) Force the Pallas kernel path (also exercises in-kernel ragged-tail
    #    masking since 200 is not a multiple of the 64-row streaming chunk).
    kk = jax.random.split(jax.random.PRNGKey(0), 3)
    batch2, rank2 = 200, 128
    factors2 = tuple(
        jax.random.normal(k, (batch2, rank2), dtype=jnp.float32) for k in kk
    )
    out_kernel = jax.block_until_ready(
        n3_forward(factors2, weight, min_pallas_elements=0)
    )
    assert jnp.allclose(out_kernel, ref_n3(factors2, weight), rtol=1e-4, atol=1e-5), (
        out_kernel, ref_n3(factors2, weight))

    print("KERNEL_OK")
</pallas_src>

<mosaic_0001>
module attributes {stable_mosaic.version = 11 : i64} {
  func.func @kernel(%arg0: i32, %arg1: i32, %arg2: memref<256x128xf32, #tpu.memory_space<vmem>>, %arg3: memref<64x128xf32, #tpu.memory_space<vmem>>) attributes {dimension_semantics = [#tpu.dimension_semantics<parallel>, #tpu.dimension_semantics<arbitrary>], iteration_bounds = array<i64: 1, 1>, scalar_prefetch = 0 : i64, scratch_operands = 0 : i64, tpu.core_type = #tpu.core_type<tc>, window_params = [{transform_indices = @transform_0, window_bounds = array<i64: 256, 128>}, {transform_indices = @transform_1, window_bounds = array<i64: 64, 128>}]} {
    %c0_i32 = arith.constant 0 : i32
    %0 = arith.cmpi eq, %arg1, %c0_i32 : i32
    %1 = arith.extui %0 : i1 to i32
    %c0_i32_0 = arith.constant 0 : i32
    %2 = arith.cmpi ne, %1, %c0_i32_0 : i32
    scf.if %2 {
      %cst_24 = arith.constant 0.000000e+00 : f32
      %71 = vector.broadcast %cst_24 : f32 to vector<64x128xf32>
      %c0_25 = arith.constant 0 : index
      %c0_26 = arith.constant 0 : index
      %72 = vector.load %arg3[%c0_25, %c0_26] : memref<64x128xf32, #tpu.memory_space<vmem>>, vector<64x128xf32>
      tpu.vector_store %arg3[%c0_25, %c0_26], %71 {strides = array<i32>} : memref<64x128xf32, #tpu.memory_space<vmem>>, vector<64x128xf32>,
    } else {
    }
    %c1_i32 = arith.constant 1 : i32
    %3 = arith.muli %arg0, %c1_i32 : i32
    %4 = arith.addi %3, %arg1 : i32
    %c256_i32 = arith.constant 256 : i32
    %5 = arith.muli %4, %c256_i32 : i32
    %6 = tpu.iota {dimensions = array<i32: 0>} : vector<64x128xi32>
    %cst = arith.constant 0.000000e+00 : f32
    %7 = vector.broadcast %cst : f32 to vector<64x128xf32>
    %c0_i32_1 = arith.constant 0 : i32
    %c64_i32 = arith.constant 64 : i32
    %8 = arith.muli %c0_i32_1, %c64_i32 : i32
    %9 = tpu.assume_multiple %8, 64 : i32
    %10 = arith.index_cast %9 : i32 to index
    %c0 = arith.constant 0 : index
    %11 = vector.load %arg2[%10, %c0] : memref<256x128xf32, #tpu.memory_space<vmem>>, vector<64x128xf32>
    %12 = math.absf %11 : vector<64x128xf32>
    %13 = arith.mulf %12, %11 : vector<64x128xf32>
    %14 = arith.mulf %13, %11 : vector<64x128xf32>
    %c64_i32_2 = arith.constant 64 : i32
    %15 = arith.muli %c0_i32_1, %c64_i32_2 : i32
    %16 = arith.addi %5, %15 : i32
    %c200_i32 = arith.constant 200 : i32
    %17 = arith.subi %c200_i32, %16 : i32
    %18 = vector.broadcast %17 : i32 to vector<64x128xi32>
    %19 = arith.cmpi slt, %6, %18 : vector<64x128xi32>
    %cst_3 = arith.constant 0.000000e+00 : f32
    %20 = vector.broadcast %cst_3 : f32 to vector<64x128xf32>
    %21 = arith.select %19, %14, %20 : vector<64x128xi1>, vector<64x128xf32>
    %22 = arith.addf %7, %21 : vector<64x128xf32>
    %c1_i32_4 = arith.constant 1 : i32
    %c64_i32_5 = arith.constant 64 : i32
    %23 = arith.muli %c1_i32_4, %c64_i32_5 : i32
    %24 = tpu.assume_multiple %23, 64 : i32
    %25 = arith.index_cast %24 : i32 to index
    %c0_6 = arith.constant 0 : index
    %26 = vector.load %arg2[%25, %c0_6] : memref<256x128xf32, #tpu.memory_space<vmem>>, vector<64x128xf32>
    %27 = math.absf %26 : vector<64x128xf32>
    %28 = arith.mulf %27, %26 : vector<64x128xf32>
    %29 = arith.mulf %28, %26 : vector<64x128xf32>
    %c64_i32_7 = arith.constant 64 : i32
    %30 = arith.muli %c1_i32_4, %c64_i32_7 : i32
    %31 = arith.addi %5, %30 : i32
    %c200_i32_8 = arith.constant 200 : i32
    %32 = arith.subi %c200_i32_8, %31 : i32
    %33 = vector.broadcast %32 : i32 to vector<64x128xi32>
    %34 = arith.cmpi slt, %6, %33 : vector<64x128xi32>
    %cst_9 = arith.constant 0.000000e+00 : f32
    %35 = vector.broadcast %cst_9 : f32 to vector<64x128xf32>
    %36 = arith.select %34, %29, %35 : vector<64x128xi1>, vector<64x128xf32>
    %37 = arith.addf %22, %36 : vector<64x128xf32>
    %c2_i32 = arith.constant 2 : i32
    %c64_i32_10 = arith.constant 64 : i32
    %38 = arith.muli %c2_i32, %c64_i32_10 : i32
    %39 = tpu.assume_multiple %38, 64 : i32
    %40 = arith.index_cast %39 : i32 to index
    %c0_11 = arith.constant 0 : index
    %41 = vector.load %arg2[%40, %c0_11] : memref<256x128xf32, #tpu.memory_space<vmem>>, vector<64x128xf32>
    %42 = math.absf %41 : vector<64x128xf32>
    %43 = arith.mulf %42, %41 : vector<64x128xf32>
    %44 = arith.mulf %43, %41 : vector<64x128xf32>
    %c64_i32_12 = arith.constant 64 : i32
    %45 = arith.muli %c2_i32, %c64_i32_12 : i32
    %46 = arith.addi %5, %45 : i32
    %c200_i32_13 = arith.constant 200 : i32
    %47 = arith.subi %c200_i32_13, %46 : i32
    %48 = vector.broadcast %47 : i32 to vector<64x128xi32>
    %49 = arith.cmpi slt, %6, %48 : vector<64x128xi32>
    %cst_14 = arith.constant 0.000000e+00 : f32
    %50 = vector.broadcast %cst_14 : f32 to vector<64x128xf32>
    %51 = arith.select %49, %44, %50 : vector<64x128xi1>, vector<64x128xf32>
    %52 = arith.addf %37, %51 : vector<64x128xf32>
    %c3_i32 = arith.constant 3 : i32
    %c64_i32_15 = arith.constant 64 : i32
    %53 = arith.muli %c3_i32, %c64_i32_15 : i32
    %54 = tpu.assume_multiple %53, 64 : i32
    %55 = arith.index_cast %54 : i32 to index
    %c0_16 = arith.constant 0 : index
    %56 = vector.load %arg2[%55, %c0_16] : memref<256x128xf32, #tpu.memory_space<vmem>>, vector<64x128xf32>
    %57 = math.absf %56 : vector<64x128xf32>
    %58 = arith.mulf %57, %56 : vector<64x128xf32>
    %59 = arith.mulf %58, %56 : vector<64x128xf32>
    %c64_i32_17 = arith.constant 64 : i32
    %60 = arith.muli %c3_i32, %c64_i32_17 : i32
    %61 = arith.addi %5, %60 : i32
    %c200_i32_18 = arith.constant 200 : i32
    %62 = arith.subi %c200_i32_18, %61 : i32
    %63 = vector.broadcast %62 : i32 to vector<64x128xi32>
    %64 = arith.cmpi slt, %6, %63 : vector<64x128xi32>
    %cst_19 = arith.constant 0.000000e+00 : f32
    %65 = vector.broadcast %cst_19 : f32 to vector<64x128xf32>
    %66 = arith.select %64, %59, %65 : vector<64x128xi1>, vector<64x128xf32>
    %67 = arith.addf %52, %66 : vector<64x128xf32>
    %c4_i32 = arith.constant 4 : i32
    %c0_20 = arith.constant 0 : index
    %c0_21 = arith.constant 0 : index
    %68 = vector.load %arg3[%c0_20, %c0_21] : memref<64x128xf32, #tpu.memory_space<vmem>>, vector<64x128xf32>
    %69 = arith.addf %68, %67 : vector<64x128xf32>
    %c0_22 = arith.constant 0 : index
    %c0_23 = arith.constant 0 : index
    %70 = vector.load %arg3[%c0_22, %c0_23] : memref<64x128xf32, #tpu.memory_space<vmem>>, vector<64x128xf32>
    tpu.vector_store %arg3[%c0_22, %c0_23], %69 {strides = array<i32>} : memref<64x128xf32, #tpu.memory_space<vmem>>, vector<64x128xf32>,
    return
  }
  func.func @transform_0(%arg0: i32, %arg1: i32) -> (i32, i32) {
    %c1_i32 = arith.constant 1 : i32
    %0 = arith.muli %arg0, %c1_i32 : i32
    %1 = arith.addi %0, %arg1 : i32
    %c0_i32 = arith.constant 0 : i32
    %2 = arith.minsi %1, %c0_i32 : i32
    %c0_i32_0 = arith.constant 0 : i32
    %c0_i32_1 = arith.constant 0 : i32
    return %2, %c0_i32_0 : i32, i32
  }
  func.func @transform_1(%arg0: i32, %arg1: i32) -> (i32, i32) {
    %c0_i32 = arith.constant 0 : i32
    %c0_i32_0 = arith.constant 0 : i32
    return %arg0, %c0_i32 : i32, i32
  }
}

</mosaic_0001>

<llo_original>
// kernel: tpu_custom_call.1
$region0: #{tpu_custom_call.1}
  #allocation0 [shape = 'u32[]', space=smem, size = 0x4, offset = 0x4, fixed_abs, tag = 'smem constant byte address 0x4 - core index']
  #allocation1 [shape = 'u32[144,128]{1,0:T(1,128)}', space=vmem, size = 0x12000, scoped, tag = 'internal scratch']
  %s0 = inlined_call_operand.hbm [shape: f32[200,128], index: 0, kind: input, shape index: {}]
  %s1 = inlined_call_operand.hbm [shape: f32[64,128], index: 1, kind: output, shape index: {}]
  %s2 = sld [smem:[#allocation0]]
  $region22: #{tpu_custom_call.1} parent=0
    _
  %s4 = ssub.s32 1, %s2
  %s5 = scalar_select 0, %s4, %s2
  $region1: #{tpu_custom_call.1} parent=0
    #allocation2 [shape = 'u8[131072]{0}', space=vmem, size = 0x20000, scoped, tag = 'input window, operand 0, single buffered']
    #allocation3 [shape = 's32[1]{0}', space=sflag, size = 0x4, scoped, tag = 'scoped memory for tpu_custom_call.1']
    #allocation4 [shape = 's32[1]{0}', space=sflag, size = 0x4, scoped, tag = 'scoped memory for tpu_custom_call.1']
    #allocation5 [shape = 'u8[32768]{0}', space=vmem, size = 0x8000, scoped, tag = 'output window, operand 0, single buffered']
    %6 = vsyncpa [#allocation3], 0
    %7 = vsyncpa [#allocation4], 0
    // Predicated region
    $region2: #{tpu_custom_call.1} parent=1 // pred_check
      _
    $region3: #{tpu_custom_call.1} parent=1 // pred_check_branch
      %9 = sbr.rel (0) target = $region5
    $region4: #{tpu_custom_call.1} parent=1 // pred_region
      %s10 = sadd.s32 0, 0
      %p11 = scmp.lt.s32.totalorder %s10, 0
      %s12 = scalar_select %p11, %s10, 0
      %s13 = smul.u32 32, %s12
      %s14 = ssub.s32 25, %s13
      %s15 = smul.u32 128, %s14
      %s17 = ssub.s32 4096, %s15
      %18 = vsyncadd [#allocation3], %s17
      %p19 = scmp.ne.s32.totalorder 0, %s15
      %s20 = smul.addr %s13, 128
      %s21 = scalar_lea.hbm %s0, %s20
      %s22 = smul.u32 8, %s14
      %s23 = sshll.u32 [#allocation2], 4
      %s24 = int_to_ptr.vmem [resolvable:$true] %s23
      %s25 = sshll.u32 %s22, 4
      %29 = dma.hbm_to_vmem [thread:$0]  (%p19), %s21, %s25, %s24, [#allocation3], 128, 128, 8
    $region5: #{tpu_custom_call.1} parent=1 // pred_fallthru
      _
    // Predicated region
    $region6: #{tpu_custom_call.1} parent=1 // pred_check
      _
    $region7: #{tpu_custom_call.1} parent=1 // pred_check_branch
      %31 = sbr.rel (0) target = $region9
    $region8: #{tpu_custom_call.1} parent=1 // pred_region
      %32 = dma.done [#allocation3], 4096
    $region9: #{tpu_custom_call.1} parent=1 // pred_fallthru
      _
    %s33 = sadd.s32 0, 0
    %p34 = scmp.lt.s32.totalorder %s33, 0
    %s35 = scalar_select %p34, %s33, 0
    %s36 = smul.u32 32, %s35
    %s37 = ssub.s32 25, %s36
    %s38 = smul.u32 128, %s37
    %p39 = scmp.eq.s32.totalorder 0, 0
    // Predicated region
    $region10: #{tpu_custom_call.1} parent=1 // pred_check
      %p40 = pneg %p39
    $region11: #{tpu_custom_call.1} parent=1 // pred_check_branch
      %42 = sbr.rel (%p40) target = $region13
    $region12: #{tpu_custom_call.1} parent=1 // pred_region
      %43 = vst [vmem:[#allocation5] sm:$0xff] 0.0
      %44 = vst [vmem:[#allocation5 + $0x8] sm:$0xff] 0.0
      %45 = vst [vmem:[#allocation5 + $0x10] sm:$0xff] 0.0
      %46 = vst [vmem:[#allocation5 + $0x18] sm:$0xff] 0.0
      %47 = vst [vmem:[#allocation5 + $0x20] sm:$0xff] 0.0
      %48 = vst [vmem:[#allocation5 + $0x28] sm:$0xff] 0.0
      %49 = vst [vmem:[#allocation5 + $0x30] sm:$0xff] 0.0
      %50 = vst [vmem:[#allocation5 + $0x38] sm:$0xff] 0.0
    $region13: #{tpu_custom_call.1} parent=1 // pred_fallthru
      _
    %s51 = sadd.s32 0, 0
    %s52 = smul.u32 %s51, 256
    %v53 = vlaneseq
    %v54 = vshrl.u32 %v53, 7
    %v55 = vadd.s32 %v54, 8
    %v56 = vadd.s32 %v54, 16
    %v57 = vadd.s32 %v54, 24
    %v58 = vadd.s32 %v54, 32
    %v59 = vadd.s32 %v54, 40
    %v60 = vadd.s32 %v54, 48
    %v61 = vadd.s32 %v54, 56
    %v62 = vld [vmem:[#allocation2] sm:$0xff]
    %v63 = vld [vmem:[#allocation2 + $0x8] sm:$0xff]
    %v64 = vld [vmem:[#allocation2 + $0x10] sm:$0xff]
    %v65 = vld [vmem:[#allocation2 + $0x18] sm:$0xff]
    %v66 = vld [vmem:[#allocation2 + $0x20] sm:$0xff]
    %v67 = vld [vmem:[#allocation2 + $0x28] sm:$0xff]
    %v68 = vld [vmem:[#allocation2 + $0x30] sm:$0xff]
    %v69 = vld [vmem:[#allocation2 + $0x38] sm:$0xff]
    %v70 = vand.u32 2147483647, %v62
    %v71 = vand.u32 2147483647, %v63
    %v72 = vand.u32 2147483647, %v64
    %v73 = vand.u32 2147483647, %v65
    %v74 = vand.u32 2147483647, %v66
    %v75 = vand.u32 2147483647, %v67
    %v76 = vand.u32 2147483647, %v68
    %v77 = vand.u32 2147483647, %v69
    %v78 = vmul.f32 %v70, %v62
    %v79 = vmul.f32 %v71, %v63
    %v80 = vmul.f32 %v72, %v64
    %v81 = vmul.f32 %v73, %v65
    %v82 = vmul.f32 %v74, %v66
    %v83 = vmul.f32 %v75, %v67
    %v84 = vmul.f32 %v76, %v68
    %v85 = vmul.f32 %v77, %v69
    %v86 = vmul.f32 %v78, %v62
    %v87 = vmul.f32 %v79, %v63
    %v88 = vmul.f32 %v80, %v64
    %v89 = vmul.f32 %v81, %v65
    %v90 = vmul.f32 %v82, %v66
    %v91 = vmul.f32 %v83, %v67
    %v92 = vmul.f32 %v84, %v68
    %v93 = vmul.f32 %v85, %v69
    %s94 = ssub.s32 200, %s52
    %v95 = vstv %s94
    %vm96 = vcmp.lt.s32.totalorder %v54, %v95
    %vm97 = vcmp.lt.s32.totalorder %v55, %v95
    %vm98 = vcmp.lt.s32.totalorder %v56, %v95
    %vm99 = vcmp.lt.s32.totalorder %v57, %v95
    %vm100 = vcmp.lt.s32.totalorder %v58, %v95
    %vm101 = vcmp.lt.s32.totalorder %v59, %v95
    %vm102 = vcmp.lt.s32.totalorder %v60, %v95
    %vm103 = vcmp.lt.s32.totalorder %v61, %v95
    %v104 = vsel %vm96, %v86, 0.0
    %v105 = vsel %vm97, %v87, 0.0
    %v106 = vsel %vm98, %v88, 0.0
    %v107 = vsel %vm99, %v89, 0.0
    %v108 = vsel %vm100, %v90, 0.0
    %v109 = vsel %vm101, %v91, 0.0
    %v110 = vsel %vm102, %v92, 0.0
    %v111 = vsel %vm103, %v93, 0.0
    %v112 = vadd.f32 %v104, 0.0
    %v113 = vadd.f32 %v105, 0.0
    %v114 = vadd.f32 %v106, 0.0
    %v115 = vadd.f32 %v107, 0.0
    %v116 = vadd.f32 %v108, 0.0
    %v117 = vadd.f32 %v109, 0.0
    %v118 = vadd.f32 %v110, 0.0
    %v119 = vadd.f32 %v111, 0.0
    %s120 = scalar_lea.vmem [#allocation2], 64
    %v121 = vld [vmem:[%s120] sm:$0xff]
    %v122 = vld [vmem:[%s120 + $0x8] sm:$0xff]
    %v123 = vld [vmem:[%s120 + $0x10] sm:$0xff]
    %v124 = vld [vmem:[%s120 + $0x18] sm:$0xff]
    %v125 = vld [vmem:[%s120 + $0x20] sm:$0xff]
    %v126 = vld [vmem:[%s120 + $0x28] sm:$0xff]
    %v127 = vld [vmem:[%s120 + $0x30] sm:$0xff]
    %v128 = vld [vmem:[%s120 + $0x38] sm:$0xff]
    %v129 = vand.u32 2147483647, %v121
    %v130 = vand.u32 2147483647, %v122
    %v131 = vand.u32 2147483647, %v123
    %v132 = vand.u32 2147483647, %v124
    %v133 = vand.u32 2147483647, %v125
    %v134 = vand.u32 2147483647, %v126
    %v135 = vand.u32 2147483647, %v127
    %v136 = vand.u32 2147483647, %v128
    %v137 = vmul.f32 %v129, %v121
    %v138 = vmul.f32 %v130, %v122
    %v139 = vmul.f32 %v131, %v123
    %v140 = vmul.f32 %v132, %v124
    %v141 = vmul.f32 %v133, %v125
    %v142 = vmul.f32 %v134, %v126
    %v143 = vmul.f32 %v135, %v127
    %v144 = vmul.f32 %v136, %v128
    %v145 = vmul.f32 %v137, %v121
    %v146 = vmul.f32 %v138, %v122
    %v147 = vmul.f32 %v139, %v123
    %v148 = vmul.f32 %v140, %v124
    %v149 = vmul.f32 %v141, %v125
    %v150 = vmul.f32 %v142, %v126
    %v151 = vmul.f32 %v143, %v127
    %v152 = vmul.f32 %v144, %v128
    %s153 = ssub.s32 136, %s52
    %v154 = vstv %s153
    %vm155 = vcmp.lt.s32.totalorder %v54, %v154
    %vm156 = vcmp.lt.s32.totalorder %v55, %v154
    %vm157 = vcmp.lt.s32.totalorder %v56, %v154
    %vm158 = vcmp.lt.s32.totalorder %v57, %v154
    %vm159 = vcmp.lt.s32.totalorder %v58, %v154
    %vm160 = vcmp.lt.s32.totalorder %v59, %v154
    %vm161 = vcmp.lt.s32.totalorder %v60, %v154
    %vm162 = vcmp.lt.s32.totalorder %v61, %v154
    %v163 = vsel %vm155, %v145, 0.0
    %v164 = vsel %vm156, %v146, 0.0
    %v165 = vsel %vm157, %v147, 0.0
    %v166 = vsel %vm158, %v148, 0.0
    %v167 = vsel %vm159, %v149, 0.0
    %v168 = vsel %vm160, %v150, 0.0
    %v169 = vsel %vm161, %v151, 0.0
    %v170 = vsel %vm162, %v152, 0.0
    %v171 = vadd.f32 %v112, %v163
    %v172 = vadd.f32 %v113, %v164
    %v173 = vadd.f32 %v114, %v165
    %v174 = vadd.f32 %v115, %v166
    %v175 = vadd.f32 %v116, %v167
    %v176 = vadd.f32 %v117, %v168
    %v177 = vadd.f32 %v118, %v169
    %v178 = vadd.f32 %v119, %v170
    %s179 = scalar_lea.vmem [#allocation2], 128
    %v180 = vld [vmem:[%s179] sm:$0xff]
    %v181 = vld [vmem:[%s179 + $0x8] sm:$0xff]
    %v182 = vld [vmem:[%s179 + $0x10] sm:$0xff]
    %v183 = vld [vmem:[%s179 + $0x18] sm:$0xff]
    %v184 = vld [vmem:[%s179 + $0x20] sm:$0xff]
    %v185 = vld [vmem:[%s179 + $0x28] sm:$0xff]
    %v186 = vld [vmem:[%s179 + $0x30] sm:$0xff]
    %v187 = vld [vmem:[%s179 + $0x38] sm:$0xff]
    %v188 = vand.u32 2147483647, %v180
    %v189 = vand.u32 2147483647, %v181
    %v190 = vand.u32 2147483647, %v182
    %v191 = vand.u32 2147483647, %v183
    %v192 = vand.u32 2147483647, %v184
    %v193 = vand.u32 2147483647, %v185
    %v194 = vand.u32 2147483647, %v186
    %v195 = vand.u32 2147483647, %v187
    %v196 = vmul.f32 %v188, %v180
    %v197 = vmul.f32 %v189, %v181
    %v198 = vmul.f32 %v190, %v182
    %v199 = vmul.f32 %v191, %v183
    %v200 = vmul.f32 %v192, %v184
    %v201 = vmul.f32 %v193, %v185
    %v202 = vmul.f32 %v194, %v186
    %v203 = vmul.f32 %v195, %v187
    %v204 = vmul.f32 %v196, %v180
    %v205 = vmul.f32 %v197, %v181
    %v206 = vmul.f32 %v198, %v182
    %v207 = vmul.f32 %v199, %v183
    %v208 = vmul.f32 %v200, %v184
    %v209 = vmul.f32 %v201, %v185
    %v210 = vmul.f32 %v202, %v186
    %v211 = vmul.f32 %v203, %v187
    %s212 = ssub.s32 72, %s52
    %v213 = vstv %s212
    %vm214 = vcmp.lt.s32.totalorder %v54, %v213
    %vm215 = vcmp.lt.s32.totalorder %v55, %v213
    %vm216 = vcmp.lt.s32.totalorder %v56, %v213
    %vm217 = vcmp.lt.s32.totalorder %v57, %v213
    %vm218 = vcmp.lt.s32.totalorder %v58, %v213
    %vm219 = vcmp.lt.s32.totalorder %v59, %v213
    %vm220 = vcmp.lt.s32.totalorder %v60, %v213
    %vm221 = vcmp.lt.s32.totalorder %v61, %v213
    %v222 = vsel %vm214, %v204, 0.0
    %v223 = vsel %vm215, %v205, 0.0
    %v224 = vsel %vm216, %v206, 0.0
    %v225 = vsel %vm217, %v207, 0.0
    %v226 = vsel %vm218, %v208, 0.0
    %v227 = vsel %vm219, %v209, 0.0
    %v228 = vsel %vm220, %v210, 0.0
    %v229 = vsel %vm221, %v211, 0.0
    %v230 = vadd.f32 %v171, %v222
    %v231 = vadd.f32 %v172, %v223
    %v232 = vadd.f32 %v173, %v224
    %v233 = vadd.f32 %v174, %v225
    %v234 = vadd.f32 %v175, %v226
    %v235 = vadd.f32 %v176, %v227
    %v236 = vadd.f32 %v177, %v228
    %v237 = vadd.f32 %v178, %v229
    %s238 = scalar_lea.vmem [#allocation2], 192
    %v239 = vld [vmem:[%s238] sm:$0xff]
    %v240 = vld [vmem:[%s238 + $0x8] sm:$0xff]
    %v241 = vld [vmem:[%s238 + $0x10] sm:$0xff]
    %v242 = vld [vmem:[%s238 + $0x18] sm:$0xff]
    %v243 = vld [vmem:[%s238 + $0x20] sm:$0xff]
    %v244 = vld [vmem:[%s238 + $0x28] sm:$0xff]
    %v245 = vld [vmem:[%s238 + $0x30] sm:$0xff]
    %v246 = vld [vmem:[%s238 + $0x38] sm:$0xff]
    %v247 = vand.u32 2147483647, %v239
    %v248 = vand.u32 2147483647, %v240
    %v249 = vand.u32 2147483647, %v241
    %v250 = vand.u32 2147483647, %v242
    %v251 = vand.u32 2147483647, %v243
    %v252 = vand.u32 2147483647, %v244
    %v253 = vand.u32 2147483647, %v245
    %v254 = vand.u32 2147483647, %v246
    %v255 = vmul.f32 %v247, %v239
    %v256 = vmul.f32 %v248, %v240
    %v257 = vmul.f32 %v249, %v241
    %v258 = vmul.f32 %v250, %v242
    %v259 = vmul.f32 %v251, %v243
    %v260 = vmul.f32 %v252, %v244
    %v261 = vmul.f32 %v253, %v245
    %v262 = vmul.f32 %v254, %v246
    %v263 = vmul.f32 %v255, %v239
    %v264 = vmul.f32 %v256, %v240
    %v265 = vmul.f32 %v257, %v241
    %v266 = vmul.f32 %v258, %v242
    %v267 = vmul.f32 %v259, %v243
    %v268 = vmul.f32 %v260, %v244
    %v269 = vmul.f32 %v261, %v245
    %v270 = vmul.f32 %v262, %v246
    %s271 = ssub.s32 8, %s52
    %v272 = vstv %s271
    %vm273 = vcmp.lt.s32.totalorder %v54, %v272
    %vm274 = vcmp.lt.s32.totalorder %v55, %v272
    %vm275 = vcmp.lt.s32.totalorder %v56, %v272
    %vm276 = vcmp.lt.s32.totalorder %v57, %v272
    %vm277 = vcmp.lt.s32.totalorder %v58, %v272
    %vm278 = vcmp.lt.s32.totalorder %v59, %v272
    %vm279 = vcmp.lt.s32.totalorder %v60, %v272
    %vm280 = vcmp.lt.s32.totalorder %v61, %v272
    %v281 = vsel %vm273, %v263, 0.0
    %v282 = vsel %vm274, %v264, 0.0
    %v283 = vsel %vm275, %v265, 0.0
    %v284 = vsel %vm276, %v266, 0.0
    %v285 = vsel %vm277, %v267, 0.0
    %v286 = vsel %vm278, %v268, 0.0
    %v287 = vsel %vm279, %v269, 0.0
    %v288 = vsel %vm280, %v270, 0.0
    %v289 = vadd.f32 %v230, %v281
    %v290 = vadd.f32 %v231, %v282
    %v291 = vadd.f32 %v232, %v283
    %v292 = vadd.f32 %v233, %v284
    %v293 = vadd.f32 %v234, %v285
    %v294 = vadd.f32 %v235, %v286
    %v295 = vadd.f32 %v236, %v287
    %v296 = vadd.f32 %v237, %v288
    %v297 = vld [vmem:[#allocation5] sm:$0xff]
    %v298 = vld [vmem:[#allocation5 + $0x8] sm:$0xff]
    %v299 = vld [vmem:[#allocation5 + $0x10] sm:$0xff]
    %v300 = vld [vmem:[#allocation5 + $0x18] sm:$0xff]
    %v301 = vld [vmem:[#allocation5 + $0x20] sm:$0xff]
    %v302 = vld [vmem:[#allocation5 + $0x28] sm:$0xff]
    %v303 = vld [vmem:[#allocation5 + $0x30] sm:$0xff]
    %v304 = vld [vmem:[#allocation5 + $0x38] sm:$0xff]
    %v305 = vadd.f32 %v297, %v289
    %v306 = vadd.f32 %v298, %v290
    %v307 = vadd.f32 %v299, %v291
    %v308 = vadd.f32 %v300, %v292
    %v309 = vadd.f32 %v301, %v293
    %v310 = vadd.f32 %v302, %v294
    %v311 = vadd.f32 %v303, %v295
    %v312 = vadd.f32 %v304, %v296
    %313 = vst [vmem:[#allocation5] sm:$0xff] %v305
    %314 = vst [vmem:[#allocation5 + $0x8] sm:$0xff] %v306
    %315 = vst [vmem:[#allocation5 + $0x10] sm:$0xff] %v307
    %316 = vst [vmem:[#allocation5 + $0x18] sm:$0xff] %v308
    %317 = vst [vmem:[#allocation5 + $0x20] sm:$0xff] %v309
    %318 = vst [vmem:[#allocation5 + $0x28] sm:$0xff] %v310
    %319 = vst [vmem:[#allocation5 + $0x30] sm:$0xff] %v311
    %320 = vst [vmem:[#allocation5 + $0x38] sm:$0xff] %v312
    // Predicated region
    $region14: #{tpu_custom_call.1} parent=1 // pred_check
      _
    $region15: #{tpu_custom_call.1} parent=1 // pred_check_branch
      %322 = sbr.rel (0) target = $region17
    $region16: #{tpu_custom_call.1} parent=1 // pred_region
      %s324 = ssub.s32 1024, 1024
      %325 = vsyncadd [#allocation4], %s324
      %s326 = sshll.u32 [#allocation5], 4
      %s327 = int_to_ptr.vmem [resolvable:$true] %s326
      %332 = dma.vmem_to_hbm [thread:$0]  %s327, 1024, %s1, [#allocation4], 128, 128, 8
    $region17: #{tpu_custom_call.1} parent=1 // pred_fallthru
      _
    // Predicated region
    $region18: #{tpu_custom_call.1} parent=1 // pred_check
      _
    $region19: #{tpu_custom_call.1} parent=1 // pred_check_branch
      %334 = sbr.rel (0) target = $region21
    $region20: #{tpu_custom_call.1} parent=1 // pred_region
      %335 = dma.done [#allocation4], 1024
    $region21: #{tpu_custom_call.1} parent=1 // pred_fallthru
      _
    %336 = vsyncpa [#allocation3], 1
    %337 = vsyncpa [#allocation4], 1

</llo_original>
